<compile_context>
chip_gen: v6e
topology: v6e:2x2x1
jax: 0.10.0
libtpu: 0.0.40
codegen_flags: <defaults>
</compile_context>

<pallas_src>
import functools

import jax
import jax.numpy as jnp
from jax.experimental import pallas as pl
from jax.experimental.pallas import tpu as pltpu


def _round_up(v: int, m: int) -> int:
    return ((v + m - 1) // m) * m


def _tlinear_kernel(w_ref, x_ref, b_ref, o_ref, acc_ref):
    """One (to, tt) output tile; K-reduction carried in acc_ref (f32 VMEM)."""
    k = pl.program_id(3)

    @pl.when(k == 0)
    def _init():
        acc_ref[...] = jnp.zeros_like(acc_ref)

    # MXU matmul: (to, tk) @ (tk, tt) accumulated in f32.
    acc_ref[...] += jnp.dot(
        w_ref[...], x_ref[...], preferred_element_type=jnp.float32)

    @pl.when(k == pl.num_programs(3) - 1)
    def _finalize():
        # Bias added exactly once per output tile, in f32, then downcast.
        o_ref[...] = (acc_ref[...] + b_ref[...].astype(jnp.float32)
                      ).astype(o_ref.dtype)


def _tlinear_pallas(x, weight, bias, *, to_max=256, tt_max=256, tk_max=512):
    """x: (B, K, T); weight: (O, K); bias: (O,) -> (B, O, T)."""
    B, K, T = x.shape
    O = weight.shape[0]
    dtype = x.dtype
    itemsize = jnp.dtype(dtype).itemsize

    # Tile sizes: as large as sensible, 128-aligned on lane/sublane so stores
    # are unmasked and the MXU runs full-width; padded dims are multiples of
    # the tile so the grid divides evenly.  Working set with these maxima is
    # ~3 MiB (double-buffered), far under every chip's scoped VMEM.
    to = min(to_max, _round_up(O, 128))
    tt = min(tt_max, _round_up(T, 128))
    tk = min(tk_max, _round_up(K, 128))
    o_pad = _round_up(O, to)
    t_pad = _round_up(T, tt)
    k_pad = _round_up(K, tk)

    # Zero-pad once in the wrapper (no-op when already aligned).  Padded K
    # columns contribute zeros to the contraction, so results are exact.
    x_p = x if (k_pad == K and t_pad == T) else jnp.pad(
        x, ((0, 0), (0, k_pad - K), (0, t_pad - T)))
    w_p = weight if (o_pad == O and k_pad == K) else jnp.pad(
        weight, ((0, o_pad - O), (0, k_pad - K)))
    b_p = (bias if o_pad == O else jnp.pad(bias, (0, o_pad - O))
           ).reshape(o_pad, 1).astype(jnp.float32)

    grid = (B, o_pad // to, t_pad // tt, k_pad // tk)

    cost = pl.CostEstimate(
        flops=2 * B * o_pad * t_pad * k_pad,
        transcendentals=0,
        bytes_accessed=(w_p.size + x_p.size + B * o_pad * t_pad) * itemsize
        + b_p.size * 4,
    )

    y_p = pl.pallas_call(
        _tlinear_kernel,
        out_shape=jax.ShapeDtypeStruct((B, o_pad, t_pad), dtype),
        grid_spec=pltpu.PrefetchScalarGridSpec(
            num_scalar_prefetch=0,
            grid=grid,
            in_specs=[
                # weight (O, K): tile (to, tk)
                pl.BlockSpec((to, tk), lambda b, j, t, k: (j, k)),
                # activations (B, K, T): tile (1, tk, tt), batch dim squeezed
                pl.BlockSpec((None, tk, tt), lambda b, j, t, k: (b, k, t)),
                # bias (O, 1): tile (to, 1)
                pl.BlockSpec((to, 1), lambda b, j, t, k: (j, 0)),
            ],
            out_specs=pl.BlockSpec((None, to, tt),
                                   lambda b, j, t, k: (b, j, t)),
            scratch_shapes=[pltpu.VMEM((to, tt), jnp.float32)],
        ),
        compiler_params=pltpu.CompilerParams(
            dimension_semantics=("parallel", "parallel", "parallel",
                                 "arbitrary"),
            vmem_limit_bytes=32 * 1024 * 1024,
        ),
        cost_estimate=cost,
    )(w_p, x_p, b_p)

    # Strip padding (no-op slice when already aligned).
    return y_p[:, :O, :T]


@jax.jit
def tlinear_forward(x, weight, bias):
    """x: (B, in_features, T); weight: (out, in); bias: (out,) -> (B, out, T)."""
    # TODO(synk): optionally cast x/weight to bf16 here for 2x MXU/bandwidth on
    # v6e/v7x (accumulation stays f32 in the kernel); kept f32 to preserve the
    # 1e-5 reference tolerance.
    return _tlinear_pallas(x, weight, bias)


def _reference(x, weight, bias):
    B, N, T = x.shape
    x2d = jnp.transpose(x, (2, 0, 1)).reshape(T * B, N)
    y2d = x2d @ weight.T + bias
    return jnp.transpose(y2d.reshape(T, B, -1), (1, 2, 0))


if __name__ == "__main__":
    B, in_features, T = 2, 32, 8
    out_features = 64

    key = jax.random.PRNGKey(0)
    kx, kw, kb = jax.random.split(key, 3)

    x = jax.random.normal(kx, (B, in_features, T), dtype=jnp.float32)
    # Deterministic init mimicking nn.Linear's U(-1/sqrt(in), 1/sqrt(in)).
    bound = 1.0 / (in_features ** 0.5)
    weight = jax.random.uniform(
        kw, (out_features, in_features), minval=-bound, maxval=bound,
        dtype=jnp.float32)
    bias = jax.random.uniform(
        kb, (out_features,), minval=-bound, maxval=bound, dtype=jnp.float32)

    y = tlinear_forward(x, weight, bias)
    jax.block_until_ready(y)

    y_ref = _reference(x, weight, bias)
    assert y.shape == (B, out_features, T), y.shape
    assert jnp.allclose(y, y_ref, atol=1e-5, rtol=1e-5)

    print("KERNEL_OK")
</pallas_src>

<mosaic_0001>
module attributes {stable_mosaic.version = 11 : i64} {
  func.func @_tlinear_kernel(%arg0: i32, %arg1: i32, %arg2: i32, %arg3: i32, %arg4: memref<128x128xf32, #tpu.memory_space<vmem>>, %arg5: memref<1x128x128xf32, #tpu.memory_space<vmem>>, %arg6: memref<128x1xf32, #tpu.memory_space<vmem>>, %arg7: memref<1x128x128xf32, #tpu.memory_space<vmem>>, %arg8: memref<128x128xf32, #tpu.memory_space<vmem>>) attributes {dimension_semantics = [#tpu.dimension_semantics<parallel>, #tpu.dimension_semantics<parallel>, #tpu.dimension_semantics<parallel>, #tpu.dimension_semantics<arbitrary>], iteration_bounds = array<i64: 2, 1, 1, 1>, scalar_prefetch = 0 : i64, scratch_operands = 1 : i64, tpu.core_type = #tpu.core_type<tc>, window_params = [{transform_indices = @transform_0, window_bounds = array<i64: 128, 128>}, {transform_indices = @transform_1, window_bounds = array<i64: 1, 128, 128>}, {transform_indices = @transform_2, window_bounds = array<i64: 128, 1>}, {transform_indices = @transform_3, window_bounds = array<i64: 1, 128, 128>}]} {
    %c0_i32 = arith.constant 0 : i32
    %0 = arith.cmpi eq, %arg3, %c0_i32 : i32
    %1 = arith.extui %0 : i1 to i32
    %c0_i32_0 = arith.constant 0 : i32
    %2 = arith.cmpi ne, %1, %c0_i32_0 : i32
    scf.if %2 {
      %cst_11 = arith.constant 0.000000e+00 : f32
      %13 = vector.broadcast %cst_11 : f32 to vector<128x128xf32>
      %c0_12 = arith.constant 0 : index
      %c0_13 = arith.constant 0 : index
      %14 = vector.load %arg8[%c0_12, %c0_13] : memref<128x128xf32, #tpu.memory_space<vmem>>, vector<128x128xf32>
      tpu.vector_store %arg8[%c0_12, %c0_13], %13 {strides = array<i32>} : memref<128x128xf32, #tpu.memory_space<vmem>>, vector<128x128xf32>,
    } else {
    }
    %c0 = arith.constant 0 : index
    %c0_1 = arith.constant 0 : index
    %3 = vector.load %arg8[%c0, %c0_1] : memref<128x128xf32, #tpu.memory_space<vmem>>, vector<128x128xf32>
    %c0_2 = arith.constant 0 : index
    %c0_3 = arith.constant 0 : index
    %4 = vector.load %arg4[%c0_2, %c0_3] : memref<128x128xf32, #tpu.memory_space<vmem>>, vector<128x128xf32>
    %c0_4 = arith.constant 0 : index
    %c0_5 = arith.constant 0 : index
    %c0_6 = arith.constant 0 : index
    %5 = vector.load %arg5[%c0_4, %c0_5, %c0_6] : memref<1x128x128xf32, #tpu.memory_space<vmem>>, vector<1x128x128xf32>
    %6 = vector.shape_cast %5 : vector<1x128x128xf32> to vector<128x128xf32>
    %cst = arith.constant dense<0.000000e+00> : vector<128x128xf32>
    %7 = tpu.matmul %4, %6, %cst {dimension_numbers = #tpu.dot_dimension_numbers<[1], [0], [0], [1], [0, 0, 1, 1], [], []>} : vector<128x128xf32>, vector<128x128xf32>, vector<128x128xf32> -> vector<128x128xf32>
    %8 = arith.addf %3, %7 : vector<128x128xf32>
    %c0_7 = arith.constant 0 : index
    %c0_8 = arith.constant 0 : index
    %9 = vector.load %arg8[%c0_7, %c0_8] : memref<128x128xf32, #tpu.memory_space<vmem>>, vector<128x128xf32>
    tpu.vector_store %arg8[%c0_7, %c0_8], %8 {strides = array<i32>} : memref<128x128xf32, #tpu.memory_space<vmem>>, vector<128x128xf32>,
    %c0_i32_9 = arith.constant 0 : i32
    %10 = arith.cmpi eq, %arg3, %c0_i32_9 : i32
    %11 = arith.extui %10 : i1 to i32
    %c0_i32_10 = arith.constant 0 : i32
    %12 = arith.cmpi ne, %11, %c0_i32_10 : i32
    scf.if %12 {
      %c0_11 = arith.constant 0 : index
      %c0_12 = arith.constant 0 : index
      %13 = vector.load %arg8[%c0_11, %c0_12] : memref<128x128xf32, #tpu.memory_space<vmem>>, vector<128x128xf32>
      %c0_13 = arith.constant 0 : index
      %c0_14 = arith.constant 0 : index
      %14 = vector.load %arg6[%c0_13, %c0_14] : memref<128x1xf32, #tpu.memory_space<vmem>>, vector<128x1xf32>
      %15 = vector.broadcast %14 : vector<128x1xf32> to vector<128x128xf32>
      %16 = arith.addf %13, %15 : vector<128x128xf32>
      %c0_15 = arith.constant 0 : index
      %c0_16 = arith.constant 0 : index
      %c0_17 = arith.constant 0 : index
      %17 = vector.load %arg7[%c0_15, %c0_16, %c0_17] : memref<1x128x128xf32, #tpu.memory_space<vmem>>, vector<1x128x128xf32>
      %18 = vector.shape_cast %17 : vector<1x128x128xf32> to vector<128x128xf32>
      %19 = vector.shape_cast %16 : vector<128x128xf32> to vector<1x128x128xf32>
      tpu.vector_store %arg7[%c0_15, %c0_16, %c0_17], %19 {strides = array<i32>} : memref<1x128x128xf32, #tpu.memory_space<vmem>>, vector<1x128x128xf32>,
    } else {
    }
    return
  }
  func.func @transform_0(%arg0: i32, %arg1: i32, %arg2: i32, %arg3: i32) -> (i32, i32) {
    %c0_i32 = arith.constant 0 : i32
    return %arg1, %arg3 : i32, i32
  }
  func.func @transform_1(%arg0: i32, %arg1: i32, %arg2: i32, %arg3: i32) -> (i32, i32, i32) {
    %c0_i32 = arith.constant 0 : i32
    return %arg0, %arg3, %arg2 : i32, i32, i32
  }
  func.func @transform_2(%arg0: i32, %arg1: i32, %arg2: i32, %arg3: i32) -> (i32, i32) {
    %c0_i32 = arith.constant 0 : i32
    %c0_i32_0 = arith.constant 0 : i32
    return %arg1, %c0_i32 : i32, i32
  }
  func.func @transform_3(%arg0: i32, %arg1: i32, %arg2: i32, %arg3: i32) -> (i32, i32, i32) {
    %c0_i32 = arith.constant 0 : i32
    return %arg0, %arg1, %arg2 : i32, i32, i32
  }
}

</mosaic_0001>

<llo_original>
// kernel: tlinear_forward.1
$region0: #{tlinear_forward.1}
  #allocation0 [shape = 'u32[]', space=smem, size = 0x4, offset = 0x4, fixed_abs, tag = 'smem constant byte address 0x4 - core index']
  #allocation1 [shape = 'u32[144,128]{1,0:T(1,128)}', space=vmem, size = 0x12000, scoped, tag = 'internal scratch']
  #allocation2 [shape = 'f32[128,128]{1,0:T(8,128)}', space=vmem, size = 0x10000, scoped, tag = 'scratch operand']
  %s0 = inlined_call_operand.vmem [shape: f32[128,128], index: 0, kind: input, shape index: {}]
  %s1 = inlined_call_operand.vmem [shape: f32[2,128,128], index: 1, kind: input, shape index: {}]
  %s2 = inlined_call_operand.vmem [shape: f32[128,1], index: 2, kind: input, shape index: {}]
  %s3 = inlined_call_operand.vmem [shape: f32[2,128,128], index: 3, kind: output, shape index: {}]
  %s4 = sld [smem:[#allocation0]]
  $region53: #{tlinear_forward.1} parent=0
    _
  %s6 = ssub.s32 1, %s4
  %s7 = scalar_select 0, %s6, %s4
  loop: start=0, step=1, limit=4
  $region2: #{tlinear_forward.1} parent=0 // loop_pre_header
    _
  $region3: #{tlinear_forward.1} parent=0 // loop_header
    %s9 = sphi 0, %s13
    %p10 = scmp.ge.s32.totalorder %s9, 4
    %s16 = sphi 0, %s42
    %s17 = sphi 0, %s38
    %s18 = sphi 0, %s34
    %s19 = sphi 0, %s30
    %s20 = sphi 0, %s16
    %s21 = sphi 0, %s17
    %s22 = sphi 0, %s18
    %s23 = sphi 0, %s19
    %s24 = sphi 0, %s20
    %s25 = sphi 0, %s21
    %s26 = sphi 0, %s22
    %s27 = sphi 0, %s23
    %s47 = sphi 0, %s49
    %s50 = sphi 0, %s47
    %s51 = sphi 0, %s50
    %s67 = sphi 0, %s51
    %s77 = sphi 0, %s79
    %s80 = sphi 0, %s77
    %s81 = sphi 0, %s80
    %s97 = sphi 0, %s81
    %s103 = sphi 0, %s105
    %s106 = sphi 0, %s103
    %s107 = sphi 0, %s106
    %s123 = sphi 0, %s107
    %s133 = sphi 0, %s135
    %s136 = sphi 0, %s133
    %s137 = sphi 0, %s136
    %s153 = sphi 0, %s137
  $region4: #{tlinear_forward.1} parent=0 // loop_header_branch
    %12 = sbr.rel (%p10) target = $region8
  $region5: #{tlinear_forward.1} parent=0 // loop_body
    %s14 = ssub.s32 %s9, 1
    %s15 = ssub.s32 %s9, 2
    %s28 = sadd.s32 1, %s19
    %p29 = scmp.ge.s32.totalorder %s28, 1
    %s30 = scalar_select %p29, 0, %s28
    %s31 = sadd.s32 1, %s18
    %s32 = scalar_select %p29, %s31, %s18
    %p33 = scmp.ge.s32.totalorder %s32, 1
    %s34 = scalar_select %p33, 0, %s32
    %s35 = sadd.s32 1, %s17
    %s36 = scalar_select %p33, %s35, %s17
    %p37 = scmp.ge.s32.totalorder %s36, 1
    %s38 = scalar_select %p37, 0, %s36
    %s39 = sadd.s32 1, %s16
    %s40 = scalar_select %p37, %s39, %s16
    %p41 = scmp.ge.s32.totalorder %s40, 2
    %s42 = scalar_select %p41, 0, %s40
    %s43 = ssub.s32 %s17, %s38
    %s44 = ssub.s32 %s19, %s30
    %s45 = sor.u32 %s43, %s44
    %p46 = scmp.eq.s32.totalorder %s45, 0
    %s48 = sadd.s32 %s47, 1
    %s49 = scalar_select %p46, %s47, %s48
    %p52 = pneg %p46
    %p53 = scmp.eq.s32.totalorder %s9, 1
    %p54 = por %p52, %p53
    %p55 = scmp.ne.s32.totalorder %s47, %s50
    %p56 = scmp.eq.s32.totalorder %s9, 0
    %p57 = por %p55, %p56
    %p58 = scmp.ne.s32.totalorder %s47, %s50
    %p59 = scmp.eq.s32.totalorder %s14, 1
    %p60 = por %p58, %p59
    %p61 = scmp.ne.s32.totalorder %s50, %s51
    %p62 = scmp.eq.s32.totalorder %s14, 0
    %p63 = por %p61, %p62
    %p64 = scmp.ne.s32.totalorder %s50, %s51
    %p65 = scmp.eq.s32.totalorder %s15, 1
    %p66 = por %p64, %p65
    %p68 = scmp.ne.s32.totalorder %s51, %s67
    %p69 = scmp.eq.s32.totalorder %s15, 0
    %p70 = por %p68, %p69
    %s71 = ssub.s32 %s16, %s42
    %s72 = ssub.s32 %s19, %s30
    %s73 = sor.u32 %s71, %s72
    %s74 = ssub.s32 %s18, %s34
    %s75 = sor.u32 %s73, %s74
    %p76 = scmp.eq.s32.totalorder %s75, 0
    %s78 = sadd.s32 %s77, 1
    %s79 = scalar_select %p76, %s77, %s78
    %p82 = pneg %p76
    %p83 = scmp.eq.s32.totalorder %s9, 1
    %p84 = por %p82, %p83
    %p85 = scmp.ne.s32.totalorder %s77, %s80
    %p86 = scmp.eq.s32.totalorder %s9, 0
    %p87 = por %p85, %p86
    %p88 = scmp.ne.s32.totalorder %s77, %s80
    %p89 = scmp.eq.s32.totalorder %s14, 1
    %p90 = por %p88, %p89
    %p91 = scmp.ne.s32.totalorder %s80, %s81
    %p92 = scmp.eq.s32.totalorder %s14, 0
    %p93 = por %p91, %p92
    %p94 = scmp.ne.s32.totalorder %s80, %s81
    %p95 = scmp.eq.s32.totalorder %s15, 1
    %p96 = por %p94, %p95
    %p98 = scmp.ne.s32.totalorder %s81, %s97
    %p99 = scmp.eq.s32.totalorder %s15, 0
    %p100 = por %p98, %p99
    %s101 = ssub.s32 %s17, %s38
    %p102 = scmp.eq.s32.totalorder %s101, 0
    %s104 = sadd.s32 %s103, 1
    %s105 = scalar_select %p102, %s103, %s104
    %p108 = pneg %p102
    %p109 = scmp.eq.s32.totalorder %s9, 1
    %p110 = por %p108, %p109
    %p111 = scmp.ne.s32.totalorder %s103, %s106
    %p112 = scmp.eq.s32.totalorder %s9, 0
    %p113 = por %p111, %p112
    %p114 = scmp.ne.s32.totalorder %s103, %s106
    %p115 = scmp.eq.s32.totalorder %s14, 1
    %p116 = por %p114, %p115
    %p117 = scmp.ne.s32.totalorder %s106, %s107
    %p118 = scmp.eq.s32.totalorder %s14, 0
    %p119 = por %p117, %p118
    %p120 = scmp.ne.s32.totalorder %s106, %s107
    %p121 = scmp.eq.s32.totalorder %s15, 1
    %p122 = por %p120, %p121
    %p124 = scmp.ne.s32.totalorder %s107, %s123
    %p125 = scmp.eq.s32.totalorder %s15, 0
    %p126 = por %p124, %p125
    %s127 = ssub.s32 %s16, %s42
    %s128 = ssub.s32 %s17, %s38
    %s129 = sor.u32 %s127, %s128
    %s130 = ssub.s32 %s18, %s34
    %s131 = sor.u32 %s129, %s130
    %p132 = scmp.eq.s32.totalorder %s131, 0
    %s134 = sadd.s32 %s133, 1
    %s135 = scalar_select %p132, %s133, %s134
    %p138 = pneg %p132
    %p139 = scmp.eq.s32.totalorder %s9, 1
    %p140 = por %p138, %p139
    %p141 = scmp.ne.s32.totalorder %s133, %s136
    %p142 = scmp.eq.s32.totalorder %s9, 0
    %p143 = por %p141, %p142
    %p144 = scmp.ne.s32.totalorder %s133, %s136
    %p145 = scmp.eq.s32.totalorder %s14, 1
    %p146 = por %p144, %p145
    %p147 = scmp.ne.s32.totalorder %s136, %s137
    %p148 = scmp.eq.s32.totalorder %s14, 0
    %p149 = por %p147, %p148
    %p150 = scmp.ne.s32.totalorder %s136, %s137
    %p151 = scmp.eq.s32.totalorder %s15, 1
    %p152 = por %p150, %p151
    %p154 = scmp.ne.s32.totalorder %s137, %s153
    %p155 = scmp.eq.s32.totalorder %s15, 0
    %p156 = por %p154, %p155
    %p157 = scmp.le.s32.totalorder 1, %s9
    %p158 = scmp.lt.s32.totalorder %s9, 3
    %p159 = pnand %p157, %p158
    %p160 = pneg %p159
    // Predicated region
    $region9: #{tlinear_forward.1} parent=5 // pred_check
      _
    $region10: #{tlinear_forward.1} parent=5 // pred_check_branch
      %162 = sbr.rel (%p159) target = $region12
    $region11: #{tlinear_forward.1} parent=5 // pred_region
      %s163 = ssub.s32 %s9, 1
      // Predicated region
      $region13: #{tlinear_forward.1} parent=11 // pred_check
        %p164 = pneg %p63
      $region14: #{tlinear_forward.1} parent=11 // pred_check_branch
        %166 = sbr.rel (%p164) target = $region16
      $region15: #{tlinear_forward.1} parent=11 // pred_region
        %s167 = smul.u32 16, %s21
        %p168 = scmp.lt.s32.totalorder %s167, 15
        %s169 = scalar_select %p168, %s167, 15
        %p170 = scmp.lt.s32.totalorder %s23, 0
        %s171 = scalar_select %p170, %s23, 0
        %s172 = sadd.s32 %s171, %s169
        %s173 = smul.addr %s172, 8
        %s174 = scalar_lea.vmem %s0, %s173
        %s175 = smul.u32 16, %s21
      $region16: #{tlinear_forward.1} parent=11 // pred_fallthru
        _
      // Predicated region
      $region17: #{tlinear_forward.1} parent=11 // pred_check
        %p176 = pneg %p119
      $region18: #{tlinear_forward.1} parent=11 // pred_check_branch
        %178 = sbr.rel (%p176) target = $region20
      $region19: #{tlinear_forward.1} parent=11 // pred_region
        %s179 = smul.u32 16, %s21
        %p180 = scmp.lt.s32.totalorder %s179, 15
        %s181 = scalar_select %p180, %s179, 15
        %s182 = smul.addr %s181, 8
        %s183 = scalar_lea.vmem %s2, %s182
        %s184 = smul.u32 16, %s21
      $region20: #{tlinear_forward.1} parent=11 // pred_fallthru
        _
    $region12: #{tlinear_forward.1} parent=5 // pred_fallthru
      _
    %p185 = scmp.lt.s32.totalorder %s9, 2
    // Predicated region
    $region21: #{tlinear_forward.1} parent=5 // pred_check
      %p186 = pneg %p185
    $region22: #{tlinear_forward.1} parent=5 // pred_check_branch
      %188 = sbr.rel (%p186) target = $region24
    $region23: #{tlinear_forward.1} parent=5 // pred_region
      // Predicated region
      $region25: #{tlinear_forward.1} parent=23 // pred_check
        %p189 = pneg %p87
      $region26: #{tlinear_forward.1} parent=23 // pred_check_branch
        %191 = sbr.rel (%p189) target = $region28
      $region27: #{tlinear_forward.1} parent=23 // pred_region
        %s192 = smul.u32 16, %s19
        %p193 = scmp.lt.s32.totalorder %s16, 1
        %s194 = scalar_select %p193, %s16, 1
        %p195 = scmp.lt.s32.totalorder %s192, 15
        %s196 = scalar_select %p195, %s192, 15
        %p197 = scmp.lt.s32.totalorder %s18, 0
        %s198 = scalar_select %p197, %s18, 0
        %s199 = sadd.s32 %s198, %s196
        %s200 = smul.addr %s194, 16
        %s201 = sadd.s32 %s199, %s200
        %s202 = smul.addr %s201, 8
        %s203 = scalar_lea.vmem %s1, %s202
        %s204 = smul.u32 16, %s19
      $region28: #{tlinear_forward.1} parent=23 // pred_fallthru
        _
    $region24: #{tlinear_forward.1} parent=5 // pred_fallthru
      _
    %p205 = scmp.le.s32.totalorder 1, %s9
    %p206 = scmp.lt.s32.totalorder %s9, 3
    %p207 = pnand %p205, %p206
    %p208 = pneg %p207
    // Predicated region
    $region29: #{tlinear_forward.1} parent=5 // pred_check
      _
    $region30: #{tlinear_forward.1} parent=5 // pred_check_branch
      %210 = sbr.rel (%p207) target = $region32
    $region31: #{tlinear_forward.1} parent=5 // pred_region
      %s211 = ssub.s32 %s9, 1
      %s212 = smul.u32 16, %s21
      %p213 = scmp.lt.s32.totalorder %s212, 15
      %s214 = scalar_select %p213, %s212, 15
      %p215 = scmp.lt.s32.totalorder %s23, 0
      %s216 = scalar_select %p215, %s23, 0
      %s217 = sadd.s32 %s216, %s214
      %s218 = smul.addr %s217, 8
      %s219 = scalar_lea.vmem %s0, %s218
      %p220 = pneg %p63
      %p221 = pneg %p60
      %s222 = smul.u32 16, %s23
      %p223 = scmp.lt.s32.totalorder %s20, 1
      %s224 = scalar_select %p223, %s20, 1
      %p225 = scmp.lt.s32.totalorder %s222, 15
      %s226 = scalar_select %p225, %s222, 15
      %p227 = scmp.lt.s32.totalorder %s22, 0
      %s228 = scalar_select %p227, %s22, 0
      %s229 = sadd.s32 %s228, %s226
      %s230 = smul.addr %s224, 16
      %s231 = sadd.s32 %s229, %s230
      %s232 = smul.addr %s231, 8
      %s233 = scalar_lea.vmem %s1, %s232
      %p234 = pneg %p93
      %p235 = pneg %p90
      %s236 = smul.u32 16, %s21
      %p237 = scmp.lt.s32.totalorder %s236, 15
      %s238 = scalar_select %p237, %s236, 15
      %s239 = smul.addr %s238, 8
      %s240 = scalar_lea.vmem %s2, %s239
      %p241 = pneg %p119
      %p242 = pneg %p116
      %p243 = pneg %p149
      %p244 = pneg %p146
      %s245 = smul.u32 16, %s21
      %p246 = scmp.lt.s32.totalorder %s20, 1
      %s247 = scalar_select %p246, %s20, 1
      %p248 = scmp.lt.s32.totalorder %s245, 15
      %s249 = scalar_select %p248, %s245, 15
      %p250 = scmp.lt.s32.totalorder %s22, 0
      %s251 = scalar_select %p250, %s22, 0
      %s252 = sadd.s32 %s251, %s249
      %s253 = smul.addr %s247, 16
      %s254 = sadd.s32 %s252, %s253
      %s255 = smul.addr %s254, 8
      %s256 = scalar_lea.vmem %s3, %s255
      %s257 = smul.u32 16, %s21
      %p258 = scmp.lt.s32.totalorder %s257, 15
      %s259 = scalar_select %p258, %s257, 15
      %p260 = scmp.lt.s32.totalorder %s23, 0
      %s261 = scalar_select %p260, %s23, 0
      %s262 = sadd.s32 %s261, %s259
      %s263 = smul.addr %s262, 8
      %s264 = scalar_lea.vmem %s0, %s263
      %s265 = smul.u32 16, %s21
      %s266 = smul.u32 16, %s23
      %p267 = scmp.lt.s32.totalorder %s20, 1
      %s268 = scalar_select %p267, %s20, 1
      %p269 = scmp.lt.s32.totalorder %s266, 15
      %s270 = scalar_select %p269, %s266, 15
      %p271 = scmp.lt.s32.totalorder %s22, 0
      %s272 = scalar_select %p271, %s22, 0
      %s273 = sadd.s32 %s272, %s270
      %s274 = smul.addr %s268, 16
      %s275 = sadd.s32 %s273, %s274
      %s276 = smul.addr %s275, 8
      %s277 = scalar_lea.vmem %s1, %s276
      %s278 = smul.u32 16, %s23
      %s279 = smul.u32 16, %s21
      %p280 = scmp.lt.s32.totalorder %s279, 15
      %s281 = scalar_select %p280, %s279, 15
      %s282 = smul.addr %s281, 8
      %s283 = scalar_lea.vmem %s2, %s282
      %s284 = smul.u32 16, %s21
      %s285 = smul.u32 16, %s21
      %p286 = scmp.lt.s32.totalorder %s20, 1
      %s287 = scalar_select %p286, %s20, 1
      %p288 = scmp.lt.s32.totalorder %s285, 15
      %s289 = scalar_select %p288, %s285, 15
      %p290 = scmp.lt.s32.totalorder %s22, 0
      %s291 = scalar_select %p290, %s22, 0
      %s292 = sadd.s32 %s291, %s289
      %s293 = smul.addr %s287, 16
      %s294 = sadd.s32 %s292, %s293
      %s295 = smul.addr %s294, 8
      %s296 = scalar_lea.vmem %s3, %s295
      %s297 = smul.u32 16, %s21
      %p298 = scmp.eq.s32.totalorder %s23, 0
      // Predicated region
      $region33: #{tlinear_forward.1} parent=31 // pred_check
        %p299 = pneg %p298
      $region34: #{tlinear_forward.1} parent=31 // pred_check_branch
        %301 = sbr.rel (%p299) target = $region36
      $region35: #{tlinear_forward.1} parent=31 // pred_region
        %302 = vst [vmem:[#allocation2] sm:$0xff] 0.0
        %303 = vst [vmem:[#allocation2 + $0x8] sm:$0xff] 0.0
        %304 = vst [vmem:[#allocation2 + $0x10] sm:$0xff] 0.0
        %305 = vst [vmem:[#allocation2 + $0x18] sm:$0xff] 0.0
        %306 = vst [vmem:[#allocation2 + $0x20] sm:$0xff] 0.0
        %307 = vst [vmem:[#allocation2 + $0x28] sm:$0xff] 0.0
        %308 = vst [vmem:[#allocation2 + $0x30] sm:$0xff] 0.0
        %309 = vst [vmem:[#allocation2 + $0x38] sm:$0xff] 0.0
        %310 = vst [vmem:[#allocation2 + $0x40] sm:$0xff] 0.0
        %311 = vst [vmem:[#allocation2 + $0x48] sm:$0xff] 0.0
        %312 = vst [vmem:[#allocation2 + $0x50] sm:$0xff] 0.0
        %313 = vst [vmem:[#allocation2 + $0x58] sm:$0xff] 0.0
        %314 = vst [vmem:[#allocation2 + $0x60] sm:$0xff] 0.0
        %315 = vst [vmem:[#allocation2 + $0x68] sm:$0xff] 0.0
        %316 = vst [vmem:[#allocation2 + $0x70] sm:$0xff] 0.0
        %317 = vst [vmem:[#allocation2 + $0x78] sm:$0xff] 0.0
      $region36: #{tlinear_forward.1} parent=31 // pred_fallthru
        _
      %v318 = vld [vmem:[#allocation2] sm:$0xff]
      %v319 = vld [vmem:[#allocation2 + $0x8] sm:$0xff]
      %v320 = vld [vmem:[#allocation2 + $0x10] sm:$0xff]
      %v321 = vld [vmem:[#allocation2 + $0x18] sm:$0xff]
      %v322 = vld [vmem:[#allocation2 + $0x20] sm:$0xff]
      %v323 = vld [vmem:[#allocation2 + $0x28] sm:$0xff]
      %v324 = vld [vmem:[#allocation2 + $0x30] sm:$0xff]
      %v325 = vld [vmem:[#allocation2 + $0x38] sm:$0xff]
      %v326 = vld [vmem:[#allocation2 + $0x40] sm:$0xff]
      %v327 = vld [vmem:[#allocation2 + $0x48] sm:$0xff]
      %v328 = vld [vmem:[#allocation2 + $0x50] sm:$0xff]
      %v329 = vld [vmem:[#allocation2 + $0x58] sm:$0xff]
      %v330 = vld [vmem:[#allocation2 + $0x60] sm:$0xff]
      %v331 = vld [vmem:[#allocation2 + $0x68] sm:$0xff]
      %v332 = vld [vmem:[#allocation2 + $0x70] sm:$0xff]
      %v333 = vld [vmem:[#allocation2 + $0x78] sm:$0xff]
      %v334 = vld [vmem:[%s264] sm:$0xff]
      %v335 = vld [vmem:[%s264 + $0x8] sm:$0xff]
      %v336 = vld [vmem:[%s264 + $0x10] sm:$0xff]
      %v337 = vld [vmem:[%s264 + $0x18] sm:$0xff]
      %v338 = vld [vmem:[%s264 + $0x20] sm:$0xff]
      %v339 = vld [vmem:[%s264 + $0x28] sm:$0xff]
      %v340 = vld [vmem:[%s264 + $0x30] sm:$0xff]
      %v341 = vld [vmem:[%s264 + $0x38] sm:$0xff]
      %v342 = vld [vmem:[%s264 + $0x40] sm:$0xff]
      %v343 = vld [vmem:[%s264 + $0x48] sm:$0xff]
      %v344 = vld [vmem:[%s264 + $0x50] sm:$0xff]
      %v345 = vld [vmem:[%s264 + $0x58] sm:$0xff]
      %v346 = vld [vmem:[%s264 + $0x60] sm:$0xff]
      %v347 = vld [vmem:[%s264 + $0x68] sm:$0xff]
      %v348 = vld [vmem:[%s264 + $0x70] sm:$0xff]
      %v349 = vld [vmem:[%s264 + $0x78] sm:$0xff]
      %v350 = vld [vmem:[%s277] sm:$0xff]
      %v351 = vld [vmem:[%s277 + $0x8] sm:$0xff]
      %v352 = vld [vmem:[%s277 + $0x10] sm:$0xff]
      %v353 = vld [vmem:[%s277 + $0x18] sm:$0xff]
      %v354 = vld [vmem:[%s277 + $0x20] sm:$0xff]
      %v355 = vld [vmem:[%s277 + $0x28] sm:$0xff]
      %v356 = vld [vmem:[%s277 + $0x30] sm:$0xff]
      %v357 = vld [vmem:[%s277 + $0x38] sm:$0xff]
      %v358 = vld [vmem:[%s277 + $0x40] sm:$0xff]
      %v359 = vld [vmem:[%s277 + $0x48] sm:$0xff]
      %v360 = vld [vmem:[%s277 + $0x50] sm:$0xff]
      %v361 = vld [vmem:[%s277 + $0x58] sm:$0xff]
      %v362 = vld [vmem:[%s277 + $0x60] sm:$0xff]
      %v363 = vld [vmem:[%s277 + $0x68] sm:$0xff]
      %v364 = vld [vmem:[%s277 + $0x70] sm:$0xff]
      %v365 = vld [vmem:[%s277 + $0x78] sm:$0xff]
      %366 = vmatprep.subr.mxu0 0.0
      %367 = vmatpush1.msra.mxu0 %v365
      %368 = vmatprep.subr.mxu0 0.0
      %369 = vmatpush1.msra.mxu0 %v364
      %370 = vmatprep.subr.mxu0 0.0
      %371 = vmatpush1.msra.mxu0 %v363
      %372 = vmatprep.subr.mxu0 0.0
      %373 = vmatpush1.msra.mxu0 %v362
      %374 = vmatprep.subr.mxu0 0.0
      %375 = vmatpush1.msra.mxu0 %v361
      %376 = vmatprep.subr.mxu0 0.0
      %377 = vmatpush1.msra.mxu0 %v360
      %378 = vmatprep.subr.mxu0 0.0
      %379 = vmatpush1.msra.mxu0 %v359
      %380 = vmatprep.subr.mxu0 0.0
      %381 = vmatpush1.msra.mxu0 %v358
      %382 = vmatprep.subr.mxu0 0.0
      %383 = vmatpush1.msra.mxu0 %v357
      %384 = vmatprep.subr.mxu0 0.0
      %385 = vmatpush1.msra.mxu0 %v356
      %386 = vmatprep.subr.mxu0 0.0
      %387 = vmatpush1.msra.mxu0 %v355
      %388 = vmatprep.subr.mxu0 0.0
      %389 = vmatpush1.msra.mxu0 %v354
      %390 = vmatprep.subr.mxu0 0.0
      %391 = vmatpush1.msra.mxu0 %v353
      %392 = vmatprep.subr.mxu0 0.0
      %393 = vmatpush1.msra.mxu0 %v352
      %394 = vmatprep.subr.mxu0 0.0
      %395 = vmatpush1.msra.mxu0 %v351
      %396 = vmatprep.subr.mxu0 0.0
      %397 = vmatpush1.msra.mxu0 %v350
      %398 = vmatprep.subr.mxu0 0.0
      %399 = vmatpush2.msra.mxu0 0.0
      %400 = vmatprep.subr.mxu0 0.0
      %401 = vmatpush2.msra.mxu0 0.0
      %402 = vmatprep.subr.mxu0 0.0
      %403 = vmatpush2.msra.mxu0 0.0
      %404 = vmatprep.subr.mxu0 0.0
      %405 = vmatpush2.msra.mxu0 0.0
      %406 = vmatprep.subr.mxu0 0.0
      %407 = vmatpush2.msra.mxu0 0.0
      %408 = vmatprep.subr.mxu0 0.0
      %409 = vmatpush2.msra.mxu0 0.0
      %410 = vmatprep.subr.mxu0 0.0
      %411 = vmatpush2.msra.mxu0 0.0
      %412 = vmatprep.subr.mxu0 0.0
      %413 = vmatpush2.msra.mxu0 0.0
      %414 = vmatprep.subr.mxu0 0.0
      %415 = vmatpush2.msra.mxu0 0.0
      %416 = vmatprep.subr.mxu0 0.0
      %417 = vmatpush2.msra.mxu0 0.0
      %418 = vmatprep.subr.mxu0 0.0
      %419 = vmatpush2.msra.mxu0 0.0
      %420 = vmatprep.subr.mxu0 0.0
      %421 = vmatpush2.msra.mxu0 0.0
      %422 = vmatprep.subr.mxu0 0.0
      %423 = vmatpush2.msra.mxu0 0.0
      %424 = vmatprep.subr.mxu0 0.0
      %425 = vmatpush2.msra.mxu0 0.0
      %426 = vmatprep.subr.mxu0 0.0
      %427 = vmatpush2.msra.mxu0 0.0
      %428 = vmatprep.subr.mxu0 0.0
      %429 = vmatpush2.msra.mxu0 0.0
      %430 = vmatprep.mubr.f32.mxu0 0.0
      %431 = vmatmul.mubr.f32.gmra.mxu0 %v334
      %v432 = vpop.f32.mrf.mxu0
      %v433 = vadd.f32 0.0, %v432
      %v434 = vpop.f32.mrf.mxu0
      %435 = vmatprep.mubr.f32.mxu0 0.0
      %436 = vmatmul.mubr.f32.gmra.mxu0 %v335
      %v437 = vpop.f32.mrf.mxu0
      %v438 = vadd.f32 0.0, %v437
      %v439 = vpop.f32.mrf.mxu0
      %440 = vmatprep.mubr.f32.mxu0 0.0
      %441 = vmatmul.mubr.f32.gmra.mxu0 %v336
      %v442 = vpop.f32.mrf.mxu0
      %v443 = vadd.f32 0.0, %v442
      %v444 = vpop.f32.mrf.mxu0
      %445 = vmatprep.mubr.f32.mxu0 0.0
      %446 = vmatmul.mubr.f32.gmra.mxu0 %v337
      %v447 = vpop.f32.mrf.mxu0
      %v448 = vadd.f32 0.0, %v447
      %v449 = vpop.f32.mrf.mxu0
      %450 = vmatprep.mubr.f32.mxu0 0.0
      %451 = vmatmul.mubr.f32.gmra.mxu0 %v338
      %v452 = vpop.f32.mrf.mxu0
      %v453 = vadd.f32 0.0, %v452
      %v454 = vpop.f32.mrf.mxu0
      %455 = vmatprep.mubr.f32.mxu0 0.0
      %456 = vmatmul.mubr.f32.gmra.mxu0 %v339
      %v457 = vpop.f32.mrf.mxu0
      %v458 = vadd.f32 0.0, %v457
      %v459 = vpop.f32.mrf.mxu0
      %460 = vmatprep.mubr.f32.mxu0 0.0
      %461 = vmatmul.mubr.f32.gmra.mxu0 %v340
      %v462 = vpop.f32.mrf.mxu0
      %v463 = vadd.f32 0.0, %v462
      %v464 = vpop.f32.mrf.mxu0
      %465 = vmatprep.mubr.f32.mxu0 0.0
      %466 = vmatmul.mubr.f32.gmra.mxu0 %v341
      %v467 = vpop.f32.mrf.mxu0
      %v468 = vadd.f32 0.0, %v467
      %v469 = vpop.f32.mrf.mxu0
      %470 = vmatprep.mubr.f32.mxu0 0.0
      %471 = vmatmul.mubr.f32.gmra.mxu0 %v342
      %v472 = vpop.f32.mrf.mxu0
      %v473 = vadd.f32 0.0, %v472
      %v474 = vpop.f32.mrf.mxu0
      %475 = vmatprep.mubr.f32.mxu0 0.0
      %476 = vmatmul.mubr.f32.gmra.mxu0 %v343
      %v477 = vpop.f32.mrf.mxu0
      %v478 = vadd.f32 0.0, %v477
      %v479 = vpop.f32.mrf.mxu0
      %480 = vmatprep.mubr.f32.mxu0 0.0
      %481 = vmatmul.mubr.f32.gmra.mxu0 %v344
      %v482 = vpop.f32.mrf.mxu0
      %v483 = vadd.f32 0.0, %v482
      %v484 = vpop.f32.mrf.mxu0
      %485 = vmatprep.mubr.f32.mxu0 0.0
      %486 = vmatmul.mubr.f32.gmra.mxu0 %v345
      %v487 = vpop.f32.mrf.mxu0
      %v488 = vadd.f32 0.0, %v487
      %v489 = vpop.f32.mrf.mxu0
      %490 = vmatprep.mubr.f32.mxu0 0.0
      %491 = vmatmul.mubr.f32.gmra.mxu0 %v346
      %v492 = vpop.f32.mrf.mxu0
      %v493 = vadd.f32 0.0, %v492
      %v494 = vpop.f32.mrf.mxu0
      %495 = vmatprep.mubr.f32.mxu0 0.0
      %496 = vmatmul.mubr.f32.gmra.mxu0 %v347
      %v497 = vpop.f32.mrf.mxu0
      %v498 = vadd.f32 0.0, %v497
      %v499 = vpop.f32.mrf.mxu0
      %500 = vmatprep.mubr.f32.mxu0 0.0
      %501 = vmatmul.mubr.f32.gmra.mxu0 %v348
      %v502 = vpop.f32.mrf.mxu0
      %v503 = vadd.f32 0.0, %v502
      %v504 = vpop.f32.mrf.mxu0
      %505 = vmatprep.mubr.f32.mxu0 0.0
      %506 = vmatmul.mubr.f32.gmra.mxu0 %v349
      %v507 = vpop.f32.mrf.mxu0
      %v508 = vadd.f32 0.0, %v507
      %v509 = vpop.f32.mrf.mxu0
      %510 = vdwg.mxu0
      %v511 = vadd.f32 %v318, %v433
      %v512 = vadd.f32 %v319, %v438
      %v513 = vadd.f32 %v320, %v443
      %v514 = vadd.f32 %v321, %v448
      %v515 = vadd.f32 %v322, %v453
      %v516 = vadd.f32 %v323, %v458
      %v517 = vadd.f32 %v324, %v463
      %v518 = vadd.f32 %v325, %v468
      %v519 = vadd.f32 %v326, %v473
      %v520 = vadd.f32 %v327, %v478
      %v521 = vadd.f32 %v328, %v483
      %v522 = vadd.f32 %v329, %v488
      %v523 = vadd.f32 %v330, %v493
      %v524 = vadd.f32 %v331, %v498
      %v525 = vadd.f32 %v332, %v503
      %v526 = vadd.f32 %v333, %v508
      %527 = vst [vmem:[#allocation2] sm:$0xff] %v511
      %528 = vst [vmem:[#allocation2 + $0x8] sm:$0xff] %v512
      %529 = vst [vmem:[#allocation2 + $0x10] sm:$0xff] %v513
      %530 = vst [vmem:[#allocation2 + $0x18] sm:$0xff] %v514
      %531 = vst [vmem:[#allocation2 + $0x20] sm:$0xff] %v515
      %532 = vst [vmem:[#allocation2 + $0x28] sm:$0xff] %v516
      %533 = vst [vmem:[#allocation2 + $0x30] sm:$0xff] %v517
      %534 = vst [vmem:[#allocation2 + $0x38] sm:$0xff] %v518
      %535 = vst [vmem:[#allocation2 + $0x40] sm:$0xff] %v519
      %536 = vst [vmem:[#allocation2 + $0x48] sm:$0xff] %v520
      %537 = vst [vmem:[#allocation2 + $0x50] sm:$0xff] %v521
      %538 = vst [vmem:[#allocation2 + $0x58] sm:$0xff] %v522
      %539 = vst [vmem:[#allocation2 + $0x60] sm:$0xff] %v523
      %540 = vst [vmem:[#allocation2 + $0x68] sm:$0xff] %v524
      %541 = vst [vmem:[#allocation2 + $0x70] sm:$0xff] %v525
      %542 = vst [vmem:[#allocation2 + $0x78] sm:$0xff] %v526
      // Predicated region
      $region37: #{tlinear_forward.1} parent=31 // pred_check
        %p543 = pneg %p298
      $region38: #{tlinear_forward.1} parent=31 // pred_check_branch
        %545 = sbr.rel (%p543) target = $region40
      $region39: #{tlinear_forward.1} parent=31 // pred_region
        %v546 = vld [vmem:[#allocation2] sm:$0xff]
        %v547 = vld [vmem:[#allocation2 + $0x8] sm:$0xff]
        %v548 = vld [vmem:[#allocation2 + $0x10] sm:$0xff]
        %v549 = vld [vmem:[#allocation2 + $0x18] sm:$0xff]
        %v550 = vld [vmem:[#allocation2 + $0x20] sm:$0xff]
        %v551 = vld [vmem:[#allocation2 + $0x28] sm:$0xff]
        %v552 = vld [vmem:[#allocation2 + $0x30] sm:$0xff]
        %v553 = vld [vmem:[#allocation2 + $0x38] sm:$0xff]
        %v554 = vld [vmem:[#allocation2 + $0x40] sm:$0xff]
        %v555 = vld [vmem:[#allocation2 + $0x48] sm:$0xff]
        %v556 = vld [vmem:[#allocation2 + $0x50] sm:$0xff]
        %v557 = vld [vmem:[#allocation2 + $0x58] sm:$0xff]
        %v558 = vld [vmem:[#allocation2 + $0x60] sm:$0xff]
        %v559 = vld [vmem:[#allocation2 + $0x68] sm:$0xff]
        %v560 = vld [vmem:[#allocation2 + $0x70] sm:$0xff]
        %v561 = vld [vmem:[#allocation2 + $0x78] sm:$0xff]
        %v562 = vld [vmem:[%s283] sm:$0xff]
        %v563 = vld [vmem:[%s283 + $0x8] sm:$0xff]
        %v564 = vld [vmem:[%s283 + $0x10] sm:$0xff]
        %v565 = vld [vmem:[%s283 + $0x18] sm:$0xff]
        %v566 = vld [vmem:[%s283 + $0x20] sm:$0xff]
        %v567 = vld [vmem:[%s283 + $0x28] sm:$0xff]
        %v568 = vld [vmem:[%s283 + $0x30] sm:$0xff]
        %v569 = vld [vmem:[%s283 + $0x38] sm:$0xff]
        %v570 = vld [vmem:[%s283 + $0x40] sm:$0xff]
        %v571 = vld [vmem:[%s283 + $0x48] sm:$0xff]
        %v572 = vld [vmem:[%s283 + $0x50] sm:$0xff]
        %v573 = vld [vmem:[%s283 + $0x58] sm:$0xff]
        %v574 = vld [vmem:[%s283 + $0x60] sm:$0xff]
        %v575 = vld [vmem:[%s283 + $0x68] sm:$0xff]
        %v576 = vld [vmem:[%s283 + $0x70] sm:$0xff]
        %v577 = vld [vmem:[%s283 + $0x78] sm:$0xff]
        %579 = vset.pattern.permute.xlu0 0
        %580 = vperm.xlu0 %579, %v562
        %v581 = vpop.permute.xlu0 %580
        %584 = vset.pattern.permute.xlu0 0
        %585 = vperm.xlu0 %584, %v563
        %v586 = vpop.permute.xlu0 %585
        %589 = vset.pattern.permute.xlu0 0
        %590 = vperm.xlu0 %589, %v564
        %v591 = vpop.permute.xlu0 %590
        %594 = vset.pattern.permute.xlu0 0
        %595 = vperm.xlu0 %594, %v565
        %v596 = vpop.permute.xlu0 %595
        %599 = vset.pattern.permute.xlu0 0
        %600 = vperm.xlu0 %599, %v566
        %v601 = vpop.permute.xlu0 %600
        %604 = vset.pattern.permute.xlu0 0
        %605 = vperm.xlu0 %604, %v567
        %v606 = vpop.permute.xlu0 %605
        %609 = vset.pattern.permute.xlu0 0
        %610 = vperm.xlu0 %609, %v568
        %v611 = vpop.permute.xlu0 %610
        %614 = vset.pattern.permute.xlu0 0
        %615 = vperm.xlu0 %614, %v569
        %v616 = vpop.permute.xlu0 %615
        %619 = vset.pattern.permute.xlu0 0
        %620 = vperm.xlu0 %619, %v570
        %v621 = vpop.permute.xlu0 %620
        %624 = vset.pattern.permute.xlu0 0
        %625 = vperm.xlu0 %624, %v571
        %v626 = vpop.permute.xlu0 %625
        %629 = vset.pattern.permute.xlu0 0
        %630 = vperm.xlu0 %629, %v572
        %v631 = vpop.permute.xlu0 %630
        %634 = vset.pattern.permute.xlu0 0
        %635 = vperm.xlu0 %634, %v573
        %v636 = vpop.permute.xlu0 %635
        %639 = vset.pattern.permute.xlu0 0
        %640 = vperm.xlu0 %639, %v574
        %v641 = vpop.permute.xlu0 %640
        %644 = vset.pattern.permute.xlu0 0
        %645 = vperm.xlu0 %644, %v575
        %v646 = vpop.permute.xlu0 %645
        %649 = vset.pattern.permute.xlu0 0
        %650 = vperm.xlu0 %649, %v576
        %v651 = vpop.permute.xlu0 %650
        %654 = vset.pattern.permute.xlu0 0
        %655 = vperm.xlu0 %654, %v577
        %v656 = vpop.permute.xlu0 %655
        %v658 = vadd.f32 %v546, %v581
        %v659 = vadd.f32 %v547, %v586
        %v660 = vadd.f32 %v548, %v591
        %v661 = vadd.f32 %v549, %v596
        %v662 = vadd.f32 %v550, %v601
        %v663 = vadd.f32 %v551, %v606
        %v664 = vadd.f32 %v552, %v611
        %v665 = vadd.f32 %v553, %v616
        %v666 = vadd.f32 %v554, %v621
        %v667 = vadd.f32 %v555, %v626
        %v668 = vadd.f32 %v556, %v631
        %v669 = vadd.f32 %v557, %v636
        %v670 = vadd.f32 %v558, %v641
        %v671 = vadd.f32 %v559, %v646
        %v672 = vadd.f32 %v560, %v651
        %v673 = vadd.f32 %v561, %v656
        %674 = vst [vmem:[%s296] sm:$0xff] %v658
        %675 = vst [vmem:[%s296 + $0x8] sm:$0xff] %v659
        %676 = vst [vmem:[%s296 + $0x10] sm:$0xff] %v660
        %677 = vst [vmem:[%s296 + $0x18] sm:$0xff] %v661
        %678 = vst [vmem:[%s296 + $0x20] sm:$0xff] %v662
        %679 = vst [vmem:[%s296 + $0x28] sm:$0xff] %v663
        %680 = vst [vmem:[%s296 + $0x30] sm:$0xff] %v664
        %681 = vst [vmem:[%s296 + $0x38] sm:$0xff] %v665
        %682 = vst [vmem:[%s296 + $0x40] sm:$0xff] %v666
        %683 = vst [vmem:[%s296 + $0x48] sm:$0xff] %v667
        %684 = vst [vmem:[%s296 + $0x50] sm:$0xff] %v668
        %685 = vst [vmem:[%s296 + $0x58] sm:$0xff] %v669
        %686 = vst [vmem:[%s296 + $0x60] sm:$0xff] %v670
        %687 = vst [vmem:[%s296 + $0x68] sm:$0xff] %v671
        %688 = vst [vmem:[%s296 + $0x70] sm:$0xff] %v672
        %689 = vst [vmem:[%s296 + $0x78] sm:$0xff] %v673
      $region40: #{tlinear_forward.1} parent=31 // pred_fallthru
        _
      %s690 = smul.u32 16, %s21
      %p691 = scmp.lt.s32.totalorder %s20, 1
      %s692 = scalar_select %p691, %s20, 1
      %p693 = scmp.lt.s32.totalorder %s690, 15
      %s694 = scalar_select %p693, %s690, 15
      %p695 = scmp.lt.s32.totalorder %s22, 0
      %s696 = scalar_select %p695, %s22, 0
      %s697 = sadd.s32 %s696, %s694
      %s698 = smul.addr %s692, 16
      %s699 = sadd.s32 %s697, %s698
      %s700 = smul.addr %s699, 8
      %s701 = scalar_lea.vmem %s3, %s700
      // Predicated region
      $region41: #{tlinear_forward.1} parent=31 // pred_check
        %p702 = pneg %p146
      $region42: #{tlinear_forward.1} parent=31 // pred_check_branch
        %704 = sbr.rel (%p702) target = $region44
      $region43: #{tlinear_forward.1} parent=31 // pred_region
        %s705 = smul.u32 16, %s21
      $region44: #{tlinear_forward.1} parent=31 // pred_fallthru
        _
    $region32: #{tlinear_forward.1} parent=5 // pred_fallthru
      _
    %p706 = scmp.le.s32.totalorder 2, %s9
    // Predicated region
    $region45: #{tlinear_forward.1} parent=5 // pred_check
      %p707 = pneg %p706
    $region46: #{tlinear_forward.1} parent=5 // pred_check_branch
      %709 = sbr.rel (%p707) target = $region48
    $region47: #{tlinear_forward.1} parent=5 // pred_region
      %s710 = ssub.s32 %s9, 2
      // Predicated region
      $region49: #{tlinear_forward.1} parent=47 // pred_check
        %p711 = pneg %p152
      $region50: #{tlinear_forward.1} parent=47 // pred_check_branch
        %713 = sbr.rel (%p711) target = $region52
      $region51: #{tlinear_forward.1} parent=47 // pred_region
        %s714 = smul.u32 16, %s25
        %p715 = scmp.lt.s32.totalorder %s24, 1
        %s716 = scalar_select %p715, %s24, 1
        %p717 = scmp.lt.s32.totalorder %s714, 15
        %s718 = scalar_select %p717, %s714, 15
        %p719 = scmp.lt.s32.totalorder %s26, 0
        %s720 = scalar_select %p719, %s26, 0
        %s721 = sadd.s32 %s720, %s718
        %s722 = smul.addr %s716, 16
        %s723 = sadd.s32 %s721, %s722
        %s724 = smul.addr %s723, 8
        %s725 = scalar_lea.vmem %s3, %s724
      $region52: #{tlinear_forward.1} parent=47 // pred_fallthru
        _
    $region48: #{tlinear_forward.1} parent=5 // pred_fallthru
      _
  $region6: #{tlinear_forward.1} parent=0 // loop_footer
    %s13 = sadd.s32 1, %s9
  $region7: #{tlinear_forward.1} parent=0 // loop_footer_branch
    %8 = sbr.rel target = $region3
  $region8: #{tlinear_forward.1} parent=0 // loop_exit
    _

</llo_original>
